<compile_context>
chip_gen: v5e
topology: v5e:2x2
jax: 0.10.0
libtpu: 0.0.40
codegen_flags: <defaults>
</compile_context>

<pallas_src>
import functools

import jax
import jax.numpy as jnp
import numpy as np
from jax.experimental import pallas as pl
from jax.experimental.pallas import tpu as pltpu


# ----------------------------------------------------------------------------
# Kernels
# ----------------------------------------------------------------------------
def _se_fused_kernel(x_ref, w1_ref, w2_ref, o_ref, *, inv_hw):
    # x_ref: (Bt, C, HW)   w1_ref: (C, Cr)   w2_ref: (Cr, C)   o_ref: (Bt, C, HW)
    x = x_ref[...]
    bt, _, hw = x.shape

    # Squeeze on the MXU: contract the spatial lane axis against a ones row
    # (batched 'bqh,bch->bqc'); accumulates to f32 natively, no f32 tile copy.
    ones = jnp.ones((bt, 1, hw), dtype=x.dtype)
    y = jnp.einsum("bqh,bch->bqc", ones, x,
                   preferred_element_type=jnp.float32)[:, 0, :] * inv_hw   # (Bt, C)

    # Excitation: FC -> ReLU -> FC -> sigmoid, all Bt rows batched on the MXU.
    h = jnp.maximum(
        jnp.dot(y, w1_ref[...], preferred_element_type=jnp.float32), 0.0)
    s = jax.nn.sigmoid(
        jnp.dot(h, w2_ref[...], preferred_element_type=jnp.float32))        # (Bt, C)

    # Scale: cast the gate down and multiply in x.dtype (no f32 tile temporaries).
    o_ref[...] = x * s.astype(x.dtype)[:, :, None]


def _se_sum_kernel(x_ref, sums_ref):
    # grid = (B, HW_pad // Ht); spatial axis last ("arbitrary" reduction).
    # x_ref: (1, C, Ht)   sums_ref: (1, 1, C) f32, resident across the spatial axis.
    @pl.when(pl.program_id(1) == 0)
    def _():
        sums_ref[...] = jnp.zeros_like(sums_ref)

    x = x_ref[...]
    ones = jnp.ones((1, 1, x.shape[2]), dtype=x.dtype)
    sums_ref[...] += jnp.einsum("bqh,bch->bqc", ones, x,
                                preferred_element_type=jnp.float32)


def _se_scale_kernel(x_ref, s_ref, o_ref):
    # x_ref: (1, C, Ht)   s_ref: (1, C, 1) in x.dtype   o_ref: (1, C, Ht)
    o_ref[...] = x_ref[...] * s_ref[...]


# ----------------------------------------------------------------------------
# Hardware-aware constants & tiling helpers
# ----------------------------------------------------------------------------
@functools.lru_cache(maxsize=None)
def _vmem_params():
    """Returns (vmem_limit_bytes, block_budget_bytes, two_tensorcores)."""
    try:
        cap = int(pltpu.get_tpu_info().vmem_capacity_bytes)
    except Exception:  # pragma: no cover - conservative fallback
        cap = 64 * 1024 * 1024
    if cap >= 96 * 1024 * 1024:
        # v5e / v6e class: 128 MiB VMEM, single TensorCore per chip.
        return 104 * 1024 * 1024, 72 * 1024 * 1024, False
    # v7x class: 64 MiB VMEM per TensorCore, 2 TensorCores per chip (heuristic:
    # use the smaller VMEM capacity as the generation proxy).
    return 52 * 1024 * 1024, 26 * 1024 * 1024, True


def _largest_divisor_at_most(n, cap):
    cap = max(1, min(n, cap))
    for d in range(cap, 0, -1):
        if n % d == 0:
            return d
    return 1


def _choose_spatial_tile(hw, c, itemsize, budget, bufs):
    """Pick a spatial tile: full HW, or a multiple of 128 (padding HW if needed)."""
    if bufs * c * hw * itemsize <= budget:
        return hw, hw                                   # full extent fits
    cap = budget // (bufs * c * itemsize)
    tile = max(128, (min(cap, hw) // 128) * 128)
    for t in range(tile, 127, -128):                    # prefer an exact divisor
        if hw % t == 0:
            return t, hw
    return tile, ((hw + tile - 1) // tile) * tile       # pad HW up with zeros


# ----------------------------------------------------------------------------
# pallas_call wrappers
# ----------------------------------------------------------------------------
def _se_fused(x_flat, w1_t, w2_t, bt, vmem_limit):
    B, C, HW = x_flat.shape
    Cr = w1_t.shape[1]
    kernel = functools.partial(_se_fused_kernel, inv_hw=1.0 / HW)
    return pl.pallas_call(
        kernel,
        out_shape=jax.ShapeDtypeStruct((B, C, HW), x_flat.dtype),
        grid_spec=pltpu.PrefetchScalarGridSpec(
            num_scalar_prefetch=0,
            grid=(B // bt,),
            in_specs=[
                pl.BlockSpec((bt, C, HW), lambda b: (b, 0, 0)),
                pl.BlockSpec((C, Cr), lambda b: (0, 0)),
                pl.BlockSpec((Cr, C), lambda b: (0, 0)),
            ],
            out_specs=pl.BlockSpec((bt, C, HW), lambda b: (b, 0, 0)),
        ),
        compiler_params=pltpu.CompilerParams(
            dimension_semantics=("parallel",),
            vmem_limit_bytes=vmem_limit,
        ),
    )(x_flat, w1_t, w2_t)


def _se_two_pass(x_flat, w1_t, w2_t, budget, vmem_limit):
    B, C, HW = x_flat.shape
    itemsize = jnp.dtype(x_flat.dtype).itemsize

    # Spatial tile for the heavier pass (x in + out double-buffered = 4 buffers).
    ht, hw_pad = _choose_spatial_tile(HW, C, itemsize, budget, bufs=4)
    if hw_pad != HW:
        x_flat = jnp.pad(x_flat, ((0, 0), (0, 0), (0, hw_pad - HW)))
    n_h = hw_pad // ht

    # Pass 1: per-image channel sums only (weights / MLP stay out of the hot loop).
    sums = pl.pallas_call(
        _se_sum_kernel,
        out_shape=jax.ShapeDtypeStruct((B, 1, C), jnp.float32),
        grid_spec=pltpu.PrefetchScalarGridSpec(
            num_scalar_prefetch=0,
            grid=(B, n_h),
            in_specs=[pl.BlockSpec((1, C, ht), lambda b, h: (b, 0, h))],
            out_specs=pl.BlockSpec((1, 1, C), lambda b, h: (b, 0, 0)),
        ),
        compiler_params=pltpu.CompilerParams(
            dimension_semantics=("parallel", "arbitrary"),
            vmem_limit_bytes=vmem_limit,
        ),
    )(x_flat)

    # Excitation once, batched over B (tiny (B,C) matmuls; plain XLA per review).
    y = sums[:, 0, :] * (1.0 / HW)
    h = jnp.maximum(jnp.dot(y, w1_t.astype(jnp.float32)), 0.0)
    gates = jax.nn.sigmoid(jnp.dot(h, w2_t.astype(jnp.float32)))
    gates = gates.astype(x_flat.dtype)[:, :, None]                   # (B, C, 1)

    # Pass 2: lane-dense rescale of x by the per-channel gate.
    out = pl.pallas_call(
        _se_scale_kernel,
        out_shape=jax.ShapeDtypeStruct((B, C, hw_pad), x_flat.dtype),
        grid_spec=pltpu.PrefetchScalarGridSpec(
            num_scalar_prefetch=0,
            grid=(B, n_h),
            in_specs=[pl.BlockSpec((1, C, ht), lambda b, h: (b, 0, h)),
                      pl.BlockSpec((1, C, 1), lambda b, h: (b, 0, 0))],
            out_specs=pl.BlockSpec((1, C, ht), lambda b, h: (b, 0, h)),
        ),
        compiler_params=pltpu.CompilerParams(
            dimension_semantics=("parallel", "parallel"),
            vmem_limit_bytes=vmem_limit,
        ),
    )(x_flat, gates)
    if hw_pad != HW:
        out = out[:, :, :HW]
    return out


def se_attention(x_nchw, w1, w2, *, force_two_pass=False, block_budget=None):
    """SE attention forward.

    x_nchw: (B, C, H, W).  w1: (C//r, C), w2: (C, C//r) in nn.Linear's native
    (out_features, in_features) layout, bias-free (as in the reference module).
    """
    B, C, H, W = x_nchw.shape
    HW = H * W
    itemsize = jnp.dtype(x_nchw.dtype).itemsize

    vmem_limit, default_budget, two_core = _vmem_params()
    budget = default_budget if block_budget is None else block_budget

    x_flat = x_nchw.reshape(B, C, HW)
    w1_t = jnp.transpose(w1)       # (C, Cr)
    w2_t = jnp.transpose(w2)       # (Cr, C)

    per_image = C * HW * itemsize
    w_bytes = (w1.size * jnp.dtype(w1.dtype).itemsize
               + w2.size * jnp.dtype(w2.dtype).itemsize)
    fixed = 2 * w_bytes + (2 << 20)            # double-buffered weights + slack
    per_bt = 4 * per_image + 32 * HW           # 2x in + 2x out buffers + ones row

    fits_fused = per_bt + fixed <= budget
    # On 2-TC chips a single-step fused grid idles one core: route B == 1 to the
    # two-pass path (its scale pass has a parallel spatial axis).
    use_fused = fits_fused and not force_two_pass and not (two_core and B == 1)

    if use_fused:
        bt_cap = max(1, (budget - fixed) // per_bt)
        if two_core and B >= 2:
            bt_cap = min(bt_cap, B // 2)       # keep >= 2 grid steps for megacore
        bt = _largest_divisor_at_most(B, bt_cap)
        out = _se_fused(x_flat, w1_t, w2_t, bt, vmem_limit)
    else:
        out = _se_two_pass(x_flat, w1_t, w2_t, budget, vmem_limit)
    return out.reshape(B, C, H, W)


# ----------------------------------------------------------------------------
# Reference & test
# ----------------------------------------------------------------------------
def se_attention_reference(x_nchw, w1, w2):
    y = jnp.mean(x_nchw, axis=(2, 3))                  # (B, C)
    h = jnp.maximum(y @ w1.T, 0.0)                     # (B, Cr)
    s = jax.nn.sigmoid(h @ w2.T)                       # (B, C)
    return x_nchw * s[:, :, None, None]


if __name__ == "__main__":
    B, C, H, W = 2, 32, 16, 16
    reduction_ratio = 16
    Cr = C // reduction_ratio

    key = jax.random.PRNGKey(0)
    kx, kw1, kw2 = jax.random.split(key, 3)

    x = jax.random.normal(kx, (B, C, H, W), dtype=jnp.float32)
    # nn.Linear(C, Cr, bias=False).weight -> (Cr, C); nn.Linear(Cr, C) -> (C, Cr).
    w1 = jax.random.normal(kw1, (Cr, C), dtype=jnp.float32) * (1.0 / np.sqrt(C))
    w2 = jax.random.normal(kw2, (C, Cr), dtype=jnp.float32) * (1.0 / np.sqrt(Cr))

    ref = jax.block_until_ready(se_attention_reference(x, w1, w2))

    # Primary (fused, single x read) path.
    out_fused = jax.block_until_ready(se_attention(x, w1, w2))
    np.testing.assert_allclose(np.asarray(out_fused), np.asarray(ref),
                               rtol=2e-5, atol=2e-5)

    # Two-pass fallback (full-HW spatial tile).
    out_two = jax.block_until_ready(se_attention(x, w1, w2, force_two_pass=True))
    np.testing.assert_allclose(np.asarray(out_two), np.asarray(ref),
                               rtol=2e-5, atol=2e-5)

    # Two-pass with forced spatial tiling (exercises the resident-sum accumulation).
    out_tiled = jax.block_until_ready(
        se_attention(x, w1, w2, force_two_pass=True, block_budget=100_000))
    np.testing.assert_allclose(np.asarray(out_tiled), np.asarray(ref),
                               rtol=2e-5, atol=2e-5)

    print("KERNEL_OK")
</pallas_src>

<mosaic_0001>
module attributes {stable_mosaic.version = 11 : i64} {
  func.func @_se_fused_kernel(%arg0: i32, %arg1: memref<1x32x256xf32, #tpu.memory_space<vmem>>, %arg2: memref<32x2xf32, #tpu.memory_space<vmem>>, %arg3: memref<2x32xf32, #tpu.memory_space<vmem>>, %arg4: memref<1x32x256xf32, #tpu.memory_space<vmem>>) attributes {dimension_semantics = [#tpu.dimension_semantics<parallel>], iteration_bounds = array<i64: 2>, scalar_prefetch = 0 : i64, scratch_operands = 0 : i64, tpu.core_type = #tpu.core_type<tc>, window_params = [{transform_indices = @transform_0, window_bounds = array<i64: 1, 32, 256>}, {pipeline_mode = #tpu.pipeline_mode<synchronous>, transform_indices = @transform_1, window_bounds = array<i64: 32, 2>}, {pipeline_mode = #tpu.pipeline_mode<synchronous>, transform_indices = @transform_2, window_bounds = array<i64: 2, 32>}, {transform_indices = @transform_3, window_bounds = array<i64: 1, 32, 256>}]} {
    %c0 = arith.constant 0 : index
    %c0_0 = arith.constant 0 : index
    %c0_1 = arith.constant 0 : index
    %0 = vector.load %arg1[%c0, %c0_0, %c0_1] : memref<1x32x256xf32, #tpu.memory_space<vmem>>, vector<1x32x256xf32>
    %cst = arith.constant 1.000000e+00 : f32
    %1 = vector.broadcast %cst : f32 to vector<1x1x256xf32>
    "tpu.trace_start"() <{level = 10 : i32, message = "bqh,bch->bqc"}> : () -> ()
    %cst_2 = arith.constant dense<0.000000e+00> : vector<1x1x32xf32>
    %2 = tpu.matmul %1, %0, %cst_2 {dimension_numbers = #tpu.dot_dimension_numbers<[2], [2], [1], [1], [0, 0, 0, 1, 1, 1], [0], [0]>} : vector<1x1x256xf32>, vector<1x32x256xf32>, vector<1x1x32xf32> -> vector<1x1x32xf32>
    "tpu.trace_stop"() : () -> ()
    %3 = vector.shape_cast %2 : vector<1x1x32xf32> to vector<1x32xf32>
    %cst_3 = arith.constant 3.906250e-03 : f32
    %4 = vector.broadcast %cst_3 : f32 to vector<1x32xf32>
    %5 = arith.mulf %3, %4 : vector<1x32xf32>
    %c0_4 = arith.constant 0 : index
    %c0_5 = arith.constant 0 : index
    %6 = vector.load %arg2[%c0_4, %c0_5] : memref<32x2xf32, #tpu.memory_space<vmem>>, vector<32x2xf32>
    %cst_6 = arith.constant dense<0.000000e+00> : vector<1x2xf32>
    %7 = tpu.matmul %5, %6, %cst_6 {dimension_numbers = #tpu.dot_dimension_numbers<[1], [0], [0], [1], [0, 0, 1, 1], [], []>} : vector<1x32xf32>, vector<32x2xf32>, vector<1x2xf32> -> vector<1x2xf32>
    %cst_7 = arith.constant 0.000000e+00 : f32
    %8 = vector.broadcast %cst_7 : f32 to vector<1x2xf32>
    %9 = arith.maximumf %7, %8 : vector<1x2xf32>
    %c0_8 = arith.constant 0 : index
    %c0_9 = arith.constant 0 : index
    %10 = vector.load %arg3[%c0_8, %c0_9] : memref<2x32xf32, #tpu.memory_space<vmem>>, vector<2x32xf32>
    %cst_10 = arith.constant dense<0.000000e+00> : vector<1x32xf32>
    %11 = tpu.matmul %9, %10, %cst_10 {dimension_numbers = #tpu.dot_dimension_numbers<[1], [0], [0], [1], [0, 0, 1, 1], [], []>} : vector<1x2xf32>, vector<2x32xf32>, vector<1x32xf32> -> vector<1x32xf32>
    %12 = arith.negf %11 : vector<1x32xf32>
    %13 = math.exp %12 : vector<1x32xf32>
    %cst_11 = arith.constant 1.000000e+00 : f32
    %14 = vector.broadcast %cst_11 : f32 to vector<1x32xf32>
    %15 = arith.addf %14, %13 : vector<1x32xf32>
    %16 = arith.divf %14, %15 : vector<1x32xf32>
    %17 = vector.shape_cast %16 : vector<1x32xf32> to vector<1x32x1xf32>
    %18 = vector.broadcast %17 : vector<1x32x1xf32> to vector<1x32x256xf32>
    %19 = arith.mulf %0, %18 : vector<1x32x256xf32>
    %c0_12 = arith.constant 0 : index
    %c0_13 = arith.constant 0 : index
    %c0_14 = arith.constant 0 : index
    %20 = vector.load %arg4[%c0_12, %c0_13, %c0_14] : memref<1x32x256xf32, #tpu.memory_space<vmem>>, vector<1x32x256xf32>
    tpu.vector_store %arg4[%c0_12, %c0_13, %c0_14], %19 {strides = array<i32>} : memref<1x32x256xf32, #tpu.memory_space<vmem>>, vector<1x32x256xf32>,
    return
  }
  func.func @transform_0(%arg0: i32) -> (i32, i32, i32) {
    %c0_i32 = arith.constant 0 : i32
    %c0_i32_0 = arith.constant 0 : i32
    %c0_i32_1 = arith.constant 0 : i32
    return %arg0, %c0_i32, %c0_i32_0 : i32, i32, i32
  }
  func.func @transform_1(%arg0: i32) -> (i32, i32) {
    %c0_i32 = arith.constant 0 : i32
    %c0_i32_0 = arith.constant 0 : i32
    %c0_i32_1 = arith.constant 0 : i32
    return %c0_i32, %c0_i32_0 : i32, i32
  }
  func.func @transform_2(%arg0: i32) -> (i32, i32) {
    %c0_i32 = arith.constant 0 : i32
    %c0_i32_0 = arith.constant 0 : i32
    %c0_i32_1 = arith.constant 0 : i32
    return %c0_i32, %c0_i32_0 : i32, i32
  }
  func.func @transform_3(%arg0: i32) -> (i32, i32, i32) {
    %c0_i32 = arith.constant 0 : i32
    %c0_i32_0 = arith.constant 0 : i32
    %c0_i32_1 = arith.constant 0 : i32
    return %arg0, %c0_i32, %c0_i32_0 : i32, i32, i32
  }
}

</mosaic_0001>

<llo_original>
// kernel: tpu_custom_call.1
$region0: #{tpu_custom_call.1}
  #allocation0 [shape = 'u32[]', space=smem, size = 0x4, offset = 0x4, fixed_abs, tag = 'smem constant byte address 0x4 - core index']
  #allocation1 [shape = 'u32[72,128]{1,0:T(1,128)}', space=vmem, size = 0x9000, scoped, tag = 'internal scratch']
  %s0 = inlined_call_operand.hbm [shape: f32[2,32,256], index: 0, kind: input, shape index: {}]
  %s1 = inlined_call_operand.vmem [shape: f32[32,2], index: 1, kind: input, shape index: {}]
  %s2 = inlined_call_operand.vmem [shape: f32[2,32], index: 2, kind: input, shape index: {}]
  %s3 = inlined_call_operand.hbm [shape: f32[2,32,256], index: 3, kind: output, shape index: {}]
  %s4 = sld [smem:[#allocation0]]
  $region49: #{tpu_custom_call.1} parent=0
    _
  %s6 = ssub.s32 1, %s4
  %s7 = scalar_select 0, %s6, %s4
  $region1: #{tpu_custom_call.1} parent=0
    #allocation2 [shape = 'u8[65536]{0}', space=vmem, size = 0x10000, scoped, tag = 'input window, operand 0']
    #allocation3 [shape = 's32[2]{0}', space=sflag, size = 0x8, scoped, tag = 'scoped memory for tpu_custom_call.1']
    #allocation4 [shape = 's32[2]{0}', space=sflag, size = 0x8, scoped, tag = 'scoped memory for tpu_custom_call.1']
    #allocation5 [shape = 'u8[65536]{0}', space=vmem, size = 0x10000, scoped, tag = 'output window, operand 0']
    %8 = vsyncpa [#allocation3], 0
    %s9 = scalar_lea.sflag [#allocation3], 1
    %10 = vsyncpa %s9, 0
    %11 = vsyncpa [#allocation4], 0
    %s12 = scalar_lea.sflag [#allocation4], 1
    %13 = vsyncpa %s12, 0
    loop: start=0, step=1, limit=4
    $region2: #{tpu_custom_call.1} parent=1 // loop_pre_header
      _
    $region3: #{tpu_custom_call.1} parent=1 // loop_header
      %s15 = sphi 0, %s19
      %p16 = scmp.ge.s32.totalorder %s15, 4
      %s25 = sphi 0, %s27
      %s28 = sphi 0, %s25
      %s29 = sphi 0, %s28
      %s45 = sphi 0, %s29
      %s49 = sphi 0, %s49
      %s51 = sphi 0, %s49
      %s52 = sphi 0, %s51
      %s66 = sphi 0, %s52
      %s70 = sphi 0, %s70
      %s72 = sphi 0, %s70
      %s73 = sphi 0, %s72
      %s87 = sphi 0, %s73
      %s93 = sphi 0, %s95
      %s96 = sphi 0, %s93
      %s97 = sphi 0, %s96
      %s113 = sphi 0, %s97
    $region4: #{tpu_custom_call.1} parent=1 // loop_header_branch
      %18 = sbr.rel (%p16) target = $region8
    $region5: #{tpu_custom_call.1} parent=1 // loop_body
      %s20 = ssub.s32 %s15, 1
      %s21 = ssub.s32 %s15, 2
      %s22 = sadd.s32 %s15, 1
      %s23 = ssub.s32 %s15, %s22
      %p24 = scmp.eq.s32.totalorder %s23, 0
      %s26 = sadd.s32 %s25, 1
      %s27 = scalar_select %p24, %s25, %s26
      %p30 = pneg %p24
      %p31 = scmp.eq.s32.totalorder %s15, 1
      %p32 = por %p30, %p31
      %p33 = scmp.ne.s32.totalorder %s25, %s28
      %p34 = scmp.eq.s32.totalorder %s15, 0
      %p35 = por %p33, %p34
      %p36 = scmp.ne.s32.totalorder %s25, %s28
      %p37 = scmp.eq.s32.totalorder %s20, 1
      %p38 = por %p36, %p37
      %p39 = scmp.ne.s32.totalorder %s28, %s29
      %p40 = scmp.eq.s32.totalorder %s20, 0
      %p41 = por %p39, %p40
      %p42 = scmp.ne.s32.totalorder %s28, %s29
      %p43 = scmp.eq.s32.totalorder %s21, 1
      %p44 = por %p42, %p43
      %p46 = scmp.ne.s32.totalorder %s29, %s45
      %p47 = scmp.eq.s32.totalorder %s21, 0
      %p48 = por %p46, %p47
      %s50 = sadd.s32 %s49, 1
      %p53 = scmp.eq.s32.totalorder %s15, 1
      %p54 = scmp.ne.s32.totalorder %s49, %s51
      %p55 = scmp.eq.s32.totalorder %s15, 0
      %p56 = por %p54, %p55
      %p57 = scmp.ne.s32.totalorder %s49, %s51
      %p58 = scmp.eq.s32.totalorder %s20, 1
      %p59 = por %p57, %p58
      %p60 = scmp.ne.s32.totalorder %s51, %s52
      %p61 = scmp.eq.s32.totalorder %s20, 0
      %p62 = por %p60, %p61
      %p63 = scmp.ne.s32.totalorder %s51, %s52
      %p64 = scmp.eq.s32.totalorder %s21, 1
      %p65 = por %p63, %p64
      %p67 = scmp.ne.s32.totalorder %s52, %s66
      %p68 = scmp.eq.s32.totalorder %s21, 0
      %p69 = por %p67, %p68
      %s71 = sadd.s32 %s70, 1
      %p74 = scmp.eq.s32.totalorder %s15, 1
      %p75 = scmp.ne.s32.totalorder %s70, %s72
      %p76 = scmp.eq.s32.totalorder %s15, 0
      %p77 = por %p75, %p76
      %p78 = scmp.ne.s32.totalorder %s70, %s72
      %p79 = scmp.eq.s32.totalorder %s20, 1
      %p80 = por %p78, %p79
      %p81 = scmp.ne.s32.totalorder %s72, %s73
      %p82 = scmp.eq.s32.totalorder %s20, 0
      %p83 = por %p81, %p82
      %p84 = scmp.ne.s32.totalorder %s72, %s73
      %p85 = scmp.eq.s32.totalorder %s21, 1
      %p86 = por %p84, %p85
      %p88 = scmp.ne.s32.totalorder %s73, %s87
      %p89 = scmp.eq.s32.totalorder %s21, 0
      %p90 = por %p88, %p89
      %s91 = ssub.s32 %s15, %s22
      %p92 = scmp.eq.s32.totalorder %s91, 0
      %s94 = sadd.s32 %s93, 1
      %s95 = scalar_select %p92, %s93, %s94
      %p98 = pneg %p92
      %p99 = scmp.eq.s32.totalorder %s15, 1
      %p100 = por %p98, %p99
      %p101 = scmp.ne.s32.totalorder %s93, %s96
      %p102 = scmp.eq.s32.totalorder %s15, 0
      %p103 = por %p101, %p102
      %p104 = scmp.ne.s32.totalorder %s93, %s96
      %p105 = scmp.eq.s32.totalorder %s20, 1
      %p106 = por %p104, %p105
      %p107 = scmp.ne.s32.totalorder %s96, %s97
      %p108 = scmp.eq.s32.totalorder %s20, 0
      %p109 = por %p107, %p108
      %p110 = scmp.ne.s32.totalorder %s96, %s97
      %p111 = scmp.eq.s32.totalorder %s21, 1
      %p112 = por %p110, %p111
      %p114 = scmp.ne.s32.totalorder %s97, %s113
      %p115 = scmp.eq.s32.totalorder %s21, 0
      %p116 = por %p114, %p115
      %p117 = scmp.le.s32.totalorder 1, %s15
      %p118 = scmp.lt.s32.totalorder %s15, 3
      %p119 = pnand %p117, %p118
      %p120 = pneg %p119
      // Predicated region
      $region9: #{tpu_custom_call.1} parent=5 // pred_check
        _
      $region10: #{tpu_custom_call.1} parent=5 // pred_check_branch
        %122 = sbr.rel (%p119) target = $region12
      $region11: #{tpu_custom_call.1} parent=5 // pred_region
        %s123 = ssub.s32 %s15, 1
        // Predicated region
        $region13: #{tpu_custom_call.1} parent=11 // pred_check
          %p124 = pneg %p62
        $region14: #{tpu_custom_call.1} parent=11 // pred_check_branch
          %126 = sbr.rel (%p124) target = $region16
        $region15: #{tpu_custom_call.1} parent=11 // pred_region
          _
        $region16: #{tpu_custom_call.1} parent=11 // pred_fallthru
          _
        // Predicated region
        $region17: #{tpu_custom_call.1} parent=11 // pred_check
          %p127 = pneg %p83
        $region18: #{tpu_custom_call.1} parent=11 // pred_check_branch
          %129 = sbr.rel (%p127) target = $region20
        $region19: #{tpu_custom_call.1} parent=11 // pred_region
          _
        $region20: #{tpu_custom_call.1} parent=11 // pred_fallthru
          _
      $region12: #{tpu_custom_call.1} parent=5 // pred_fallthru
        _
      %p130 = scmp.lt.s32.totalorder %s15, 2
      // Predicated region
      $region21: #{tpu_custom_call.1} parent=5 // pred_check
        %p131 = pneg %p130
      $region22: #{tpu_custom_call.1} parent=5 // pred_check_branch
        %133 = sbr.rel (%p131) target = $region24
      $region23: #{tpu_custom_call.1} parent=5 // pred_region
        // Predicated region
        $region25: #{tpu_custom_call.1} parent=23 // pred_check
          %p134 = pneg %p35
        $region26: #{tpu_custom_call.1} parent=23 // pred_check_branch
          %136 = sbr.rel (%p134) target = $region28
        $region27: #{tpu_custom_call.1} parent=23 // pred_region
          %s137 = sand.u32 %s25, 1
          %s138 = scalar_lea.sflag [#allocation3], %s137
          %s139 = sand.u32 %s25, 1
          %s140 = smul.addr %s139, 64
          %s141 = scalar_lea.vmem [#allocation2], %s140
          %143 = vsyncadd %s138, 0
          %s144 = smul.addr %s15, 8
          %s145 = smul.addr %s144, 8
          %s146 = scalar_lea.hbm %s0, %s145
          %s147 = sshll.u32 %s146, 4
          %s148 = int_to_ptr.hbm [resolvable:$true] %s147
          %s149 = sshll.u32 %s141, 4
          %s150 = int_to_ptr.vmem [resolvable:$true] %s149
          %155 = dma.hbm_to_vmem [thread:$0]  %s148, 1024, %s150, %s138, 256, 256, 16
        $region28: #{tpu_custom_call.1} parent=23 // pred_fallthru
          _
      $region24: #{tpu_custom_call.1} parent=5 // pred_fallthru
        _
      %p156 = scmp.le.s32.totalorder 1, %s15
      %p157 = scmp.lt.s32.totalorder %s15, 3
      %p158 = pnand %p156, %p157
      %p159 = pneg %p158
      // Predicated region
      $region29: #{tpu_custom_call.1} parent=5 // pred_check
        _
      $region30: #{tpu_custom_call.1} parent=5 // pred_check_branch
        %161 = sbr.rel (%p158) target = $region32
      $region31: #{tpu_custom_call.1} parent=5 // pred_region
        %s162 = ssub.s32 %s15, 1
        %s163 = sand.u32 %s28, 1
        %s164 = scalar_lea.sflag [#allocation3], %s163
        %s165 = sand.u32 %s28, 1
        %s166 = smul.addr %s165, 64
        %s167 = scalar_lea.vmem [#allocation2], %s166
        // Predicated region
        $region33: #{tpu_custom_call.1} parent=31 // pred_check
          %p168 = pneg %p41
        $region34: #{tpu_custom_call.1} parent=31 // pred_check_branch
          %170 = sbr.rel (%p168) target = $region36
        $region35: #{tpu_custom_call.1} parent=31 // pred_region
          %172 = dma.done %s164, 1024
        $region36: #{tpu_custom_call.1} parent=31 // pred_fallthru
          _
        %s173 = sand.u32 %s28, 1
        %s174 = scalar_lea.sflag [#allocation3], %s173
        %s175 = sand.u32 %s28, 1
        %s176 = smul.addr %s175, 64
        %s177 = scalar_lea.vmem [#allocation2], %s176
        %p178 = pneg %p41
        %p179 = pneg %p38
        %p180 = pneg %p62
        %p181 = pneg %p59
        %p182 = pneg %p83
        %p183 = pneg %p80
        %p184 = pneg %p109
        %p185 = pneg %p106
        %s186 = sand.u32 %s96, 1
        %s187 = scalar_lea.sflag [#allocation4], %s186
        %s188 = sand.u32 %s96, 1
        %s189 = smul.addr %s188, 64
        %s190 = scalar_lea.vmem [#allocation5], %s189
        %v191 = vld [vmem:[%s167] sm:$0xff]
        %v192 = vld [vmem:[%s167 + $0x8] sm:$0xff]
        %v193 = vld [vmem:[%s167 + $0x10] sm:$0xff]
        %v194 = vld [vmem:[%s167 + $0x18] sm:$0xff]
        %v195 = vld [vmem:[%s167 + $0x20] sm:$0xff]
        %v196 = vld [vmem:[%s167 + $0x28] sm:$0xff]
        %v197 = vld [vmem:[%s167 + $0x30] sm:$0xff]
        %v198 = vld [vmem:[%s167 + $0x38] sm:$0xff]
        %199 = vmatpush.xpose.msra.mxu0 0.0
        %200 = vmatpush.xpose.msra.mxu0 0.0
        %201 = vmatpush.xpose.msra.mxu0 0.0
        %202 = vmatpush.xpose.msra.mxu0 0.0
        %203 = vmatpush.xpose.msra.mxu0 0.0
        %204 = vmatpush.xpose.msra.mxu0 0.0
        %205 = vmatpush.xpose.msra.mxu0 0.0
        %206 = vmatpush.xpose.msra.mxu0 0.0
        %207 = vmatpush.xpose.msra.mxu0 0.0
        %208 = vmatpush.xpose.msra.mxu0 0.0
        %209 = vmatpush.xpose.msra.mxu0 0.0
        %210 = vmatpush.xpose.msra.mxu0 0.0
        %211 = vmatpush.xpose.msra.mxu0 %v197
        %212 = vmatpush.xpose.msra.mxu0 %v195
        %213 = vmatpush.xpose.msra.mxu0 %v193
        %214 = vmatpush.xpose.msra.mxu0 %v191
        %215 = vmatmul.f32.gmra.mxu0 1.0
        %v216 = vpop.f32.mrf.mxu0
        %v217 = vadd.f32 0.0, %v216
        %218 = vdwg.mxu0
        %219 = vmatpush.xpose.msra.mxu0 0.0
        %220 = vmatpush.xpose.msra.mxu0 0.0
        %221 = vmatpush.xpose.msra.mxu0 0.0
        %222 = vmatpush.xpose.msra.mxu0 0.0
        %223 = vmatpush.xpose.msra.mxu0 0.0
        %224 = vmatpush.xpose.msra.mxu0 0.0
        %225 = vmatpush.xpose.msra.mxu0 0.0
        %226 = vmatpush.xpose.msra.mxu0 0.0
        %227 = vmatpush.xpose.msra.mxu0 0.0
        %228 = vmatpush.xpose.msra.mxu0 0.0
        %229 = vmatpush.xpose.msra.mxu0 0.0
        %230 = vmatpush.xpose.msra.mxu0 0.0
        %231 = vmatpush.xpose.msra.mxu0 %v198
        %232 = vmatpush.xpose.msra.mxu0 %v196
        %233 = vmatpush.xpose.msra.mxu0 %v194
        %234 = vmatpush.xpose.msra.mxu0 %v192
        %235 = vmatmul.f32.gmra.mxu0 1.0
        %v236 = vpop.f32.mrf.mxu0
        %v237 = vadd.f32 %v217, %v236
        %238 = vdwg.mxu0
        %v239 = vmul.f32 %v237, 0.00390625
        %v240 = vld [vmem:[%s1] sm:$0xff]
        %v241 = vld [vmem:[%s1 + $0x8] sm:$0xff]
        %v242 = vld [vmem:[%s1 + $0x10] sm:$0xff]
        %v243 = vld [vmem:[%s1 + $0x18] sm:$0xff]
        %vm244 = vcmask 261120
        %v246 = vsel %vm244, %v239, 0
        %248 = vmatpush.msra.mxu0 0.0
        %249 = vmatpush.msra.mxu0 0.0
        %250 = vmatpush.msra.mxu0 0.0
        %251 = vmatpush.msra.mxu0 0.0
        %252 = vmatpush.msra.mxu0 0.0
        %253 = vmatpush.msra.mxu0 0.0
        %254 = vmatpush.msra.mxu0 0.0
        %255 = vmatpush.msra.mxu0 0.0
        %256 = vmatpush.msra.mxu0 0.0
        %257 = vmatpush.msra.mxu0 0.0
        %258 = vmatpush.msra.mxu0 0.0
        %259 = vmatpush.msra.mxu0 0.0
        %260 = vmatpush.msra.mxu0 %v243
        %261 = vmatpush.msra.mxu0 %v242
        %262 = vmatpush.msra.mxu0 %v241
        %263 = vmatpush.msra.mxu0 %v240
        %264 = vmatmul.f32.gmra.mxu0 %v246
        %v265 = vpop.f32.mrf.mxu0
        %v266 = vadd.f32 0.0, %v265
        %267 = vdwg.mxu0
        %v268 = vmax.f32 %v266, 0.0
        %v269 = vld [vmem:[%s2] sm:$0x3]
        %vm270 = vcmask 15360
        %v272 = vsel %vm270, %v268, 0
        %vm274 = vcmask 1041408
        %v276 = vsel %vm274, %v269, 0
        %278 = vmatpush.msra.mxu0 0.0
        %279 = vmatpush.msra.mxu0 0.0
        %280 = vmatpush.msra.mxu0 0.0
        %281 = vmatpush.msra.mxu0 0.0
        %282 = vmatpush.msra.mxu0 0.0
        %283 = vmatpush.msra.mxu0 0.0
        %284 = vmatpush.msra.mxu0 0.0
        %285 = vmatpush.msra.mxu0 0.0
        %286 = vmatpush.msra.mxu0 0.0
        %287 = vmatpush.msra.mxu0 0.0
        %288 = vmatpush.msra.mxu0 0.0
        %289 = vmatpush.msra.mxu0 0.0
        %290 = vmatpush.msra.mxu0 0.0
        %291 = vmatpush.msra.mxu0 0.0
        %292 = vmatpush.msra.mxu0 0.0
        %293 = vmatpush.msra.mxu0 %v276
        %294 = vmatmul.f32.gmra.mxu0 %v272
        %v295 = vpop.f32.mrf.mxu0
        %v296 = vadd.f32 0.0, %v295
        %297 = vdwg.mxu0
        %v298 = vxor.u32 %v296, 2147483648
        %v299 = vmul.f32 %v298, 1.442695
        %v300 = vpow.pop %v299
        %v301 = vadd.f32 %v300, 1.0
        %v302 = vrcp.pop %v301
        %v303 = vmul.f32 %v301, %v302
        %v304 = vsub.f32 1.0, %v303
        %v305 = vmul.f32 %v302, %v304
        %v306 = vadd.f32 %v302, %v305
        %vm307 = vweird.f32 %v301
        %vm308 = vweird.f32 %v302
        %vm309 = vmor %vm307, %vm308
        %v310 = vsel %vm309, %v302, %v306
        %v311 = vand.u32 2147483647, %v301
        %vm312 = vcmp.eq.f32.partialorder %v311, 8.507059e+37
        %v313 = vand.u32 %v301, 2147483648
        %v314 = vor.u32 1.1754944e-38, %v313
        %v315 = vsel %vm312, %v314, %v310
        %v316 = vmul.f32 1.0, %v315
        %v317 = vperm.slane %v316, 0
        %v318 = vlaneseq
        %v319 = vshrl.u32 %v318, 7
        %321 = vset.pattern.permute.xlu0 %v319
        %322 = vperm.xlu0 %321, %v317
        %v323 = vpop.permute.xlu0 %322
        %v324 = vlaneseq
        %v325 = vshrl.u32 %v324, 7
        %v326 = vadd.s32 %v325, 8
        %327 = vset.pattern.permute.xlu0 %v326
        %328 = vperm.xlu0 %327, %v317
        %v329 = vpop.permute.xlu0 %328
        %v330 = vlaneseq
        %v331 = vshrl.u32 %v330, 7
        %v332 = vadd.s32 %v331, 16
        %333 = vset.pattern.permute.xlu0 %v332
        %334 = vperm.xlu0 %333, %v317
        %v335 = vpop.permute.xlu0 %334
        %v336 = vlaneseq
        %v337 = vshrl.u32 %v336, 7
        %v338 = vadd.s32 %v337, 24
        %339 = vset.pattern.permute.xlu0 %v338
        %340 = vperm.xlu0 %339, %v317
        %v341 = vpop.permute.xlu0 %340
        %v342 = vmul.f32 %v191, %v323
        %v343 = vmul.f32 %v192, %v323
        %v344 = vmul.f32 %v193, %v329
        %v345 = vmul.f32 %v194, %v329
        %v346 = vmul.f32 %v195, %v335
        %v347 = vmul.f32 %v196, %v335
        %v348 = vmul.f32 %v197, %v341
        %v349 = vmul.f32 %v198, %v341
        %350 = vst [vmem:[%s190] sm:$0xff] %v342
        %351 = vst [vmem:[%s190 + $0x8] sm:$0xff] %v343
        %352 = vst [vmem:[%s190 + $0x10] sm:$0xff] %v344
        %353 = vst [vmem:[%s190 + $0x18] sm:$0xff] %v345
        %354 = vst [vmem:[%s190 + $0x20] sm:$0xff] %v346
        %355 = vst [vmem:[%s190 + $0x28] sm:$0xff] %v347
        %356 = vst [vmem:[%s190 + $0x30] sm:$0xff] %v348
        %357 = vst [vmem:[%s190 + $0x38] sm:$0xff] %v349
        %s358 = sand.u32 %s96, 1
        %s359 = scalar_lea.sflag [#allocation4], %s358
        %s360 = sand.u32 %s96, 1
        %s361 = smul.addr %s360, 64
        %s362 = scalar_lea.vmem [#allocation5], %s361
        // Predicated region
        $region37: #{tpu_custom_call.1} parent=31 // pred_check
          %p363 = pneg %p106
        $region38: #{tpu_custom_call.1} parent=31 // pred_check_branch
          %365 = sbr.rel (%p363) target = $region40
        $region39: #{tpu_custom_call.1} parent=31 // pred_region
          %367 = vsyncadd %s359, 0
          %s368 = smul.addr %s20, 8
          %s369 = smul.addr %s368, 8
          %s370 = scalar_lea.hbm %s3, %s369
          %s371 = sshll.u32 %s362, 4
          %s372 = int_to_ptr.vmem [resolvable:$true] %s371
          %s373 = sshll.u32 %s370, 4
          %s374 = int_to_ptr.hbm [resolvable:$true] %s373
          %379 = dma.vmem_to_hbm [thread:$0]  %s372, 1024, %s374, %s359, 256, 256, 16
        $region40: #{tpu_custom_call.1} parent=31 // pred_fallthru
          _
      $region32: #{tpu_custom_call.1} parent=5 // pred_fallthru
        _
      %p380 = scmp.le.s32.totalorder 2, %s15
      // Predicated region
      $region41: #{tpu_custom_call.1} parent=5 // pred_check
        %p381 = pneg %p380
      $region42: #{tpu_custom_call.1} parent=5 // pred_check_branch
        %383 = sbr.rel (%p381) target = $region44
      $region43: #{tpu_custom_call.1} parent=5 // pred_region
        %s384 = ssub.s32 %s15, 2
        // Predicated region
        $region45: #{tpu_custom_call.1} parent=43 // pred_check
          %p385 = pneg %p112
        $region46: #{tpu_custom_call.1} parent=43 // pred_check_branch
          %387 = sbr.rel (%p385) target = $region48
        $region47: #{tpu_custom_call.1} parent=43 // pred_region
          %s388 = sand.u32 %s97, 1
          %s389 = scalar_lea.sflag [#allocation4], %s388
          %s390 = sand.u32 %s97, 1
          %s391 = smul.addr %s390, 64
          %s392 = scalar_lea.vmem [#allocation5], %s391
          %394 = dma.done %s389, 1024
        $region48: #{tpu_custom_call.1} parent=43 // pred_fallthru
          _
      $region44: #{tpu_custom_call.1} parent=5 // pred_fallthru
        _
    $region6: #{tpu_custom_call.1} parent=1 // loop_footer
      %s19 = sadd.s32 1, %s15
    $region7: #{tpu_custom_call.1} parent=1 // loop_footer_branch
      %14 = sbr.rel target = $region3
    $region8: #{tpu_custom_call.1} parent=1 // loop_exit
      _
    %395 = vsyncpa [#allocation3], 1
    %s396 = scalar_lea.sflag [#allocation3], 1
    %397 = vsyncpa %s396, 1
    %398 = vsyncpa [#allocation4], 1
    %s399 = scalar_lea.sflag [#allocation4], 1
    %400 = vsyncpa %s399, 1

</llo_original>
